<compile_context>
chip_gen: v6e
topology: v6e:2x2x1
jax: 0.10.0
libtpu: 0.0.40
codegen_flags: <defaults>
</compile_context>

<pallas_src>
import jax
import jax.numpy as jnp
from jax.experimental import pallas as pl
from jax.experimental.pallas import tpu as pltpu


def _round_up(v, m):
    return (v + m - 1) // m * m


def _pad_axis(arr, axis, target):
    pad = target - arr.shape[axis]
    if pad == 0:
        return arr
    widths = [(0, 0)] * arr.ndim
    widths[axis] = (0, pad)
    return jnp.pad(arr, widths)


def _vmem_capacity_bytes():
    # Physical VMEM per TensorCore (v5e/v6e: 128 MiB, v7x: 64 MiB). Conservative fallback.
    try:
        return int(pltpu.get_tpu_info().vmem_capacity_bytes)
    except Exception:
        return 64 << 20


def prepare_lora_qkv_params(w_qkv, b_qkv, w_a, b_a, w_b, b_b, scaling,
                            *, compute_dtype=jnp.bfloat16):
    """One-time parameter packing (call once; frozen params, so keep the result around).

    w_qkv: [O, D], b_qkv: [O], w_a: [R, D], b_a: [R], w_b: [O, R], b_b: [O]
    Returns pre-transposed, pre-cast, lane-padded weights with scaling folded into Wb^T
    and all three biases folded into a single f32 bias row.
    """
    O, D = w_qkv.shape
    R = w_a.shape[0]
    cdt = jnp.dtype(compute_dtype)
    f32 = jnp.float32
    o_pad = _round_up(O, 128)   # lane-dense output stores
    r_pad = _round_up(R, 128)   # lane-dense LoRA contraction (zero padding -> no-op math)

    wqkv_t = _pad_axis(jnp.transpose(w_qkv).astype(cdt), 1, o_pad)                 # (D, Op)
    wa_t = _pad_axis(jnp.transpose(w_a).astype(cdt), 1, r_pad)                     # (D, Rp)
    wb_scaled_t = (float(scaling) * jnp.transpose(w_b).astype(f32)).astype(cdt)    # (R, O)
    wb_t = _pad_axis(_pad_axis(wb_scaled_t, 0, r_pad), 1, o_pad)                   # (Rp, Op)
    bias = (b_qkv.astype(f32)
            + float(scaling) * (b_a.astype(f32) @ jnp.transpose(w_b).astype(f32)
                                + b_b.astype(f32)))
    bias = _pad_axis(bias.reshape(1, O), 1, o_pad)                                 # (1, Op) f32

    return {
        "wqkv_t": wqkv_t, "wa_t": wa_t, "wb_t": wb_t, "bias": bias,
        "in_features": int(D), "out_features": int(O),
        "rank_padded": int(r_pad), "compute_dtype": cdt,
    }


def _lora_qkv_kernel(x_ref, wqkv_ref, wa_ref, wb_ref, bias_ref, o_ref, a_scratch):
    """One (row-tile i, output-tile j) block of the fused qkv + LoRA forward.

    x_ref    : (TM, D)    input rows (block index invariant in j -> DMA'd once per row tile)
    wqkv_ref : (D, TN)    frozen qkv weight slice (pre-transposed, compute dtype)
    wa_ref   : (D, Rp)    lora_a weight (pre-transposed, rank zero-padded; grid invariant)
    wb_ref   : (Rp, TN)   lora_b weight slice (pre-transposed, pre-scaled by alpha/rank)
    bias_ref : (1, TN)    combined bias = b_qkv + scaling*(b_a @ Wb^T + b_b), f32
    o_ref    : (TM, TN)   output block
    a_scratch: (TM, Rp)   LoRA activation x @ Wa^T, computed once per row tile (j == 0)

    NOTE: the a_scratch carry across j is only correct while the j axis is the innermost,
    sequentially executed ("arbitrary") grid axis on a single core. Do not mark j "parallel".
    """
    xv = x_ref[...].astype(wqkv_ref.dtype)

    @pl.when(pl.program_id(1) == 0)
    def _():
        a_scratch[...] = jnp.dot(
            xv, wa_ref[...], preferred_element_type=jnp.float32
        ).astype(a_scratch.dtype)

    frozen = jnp.dot(xv, wqkv_ref[...], preferred_element_type=jnp.float32)
    lora = jnp.dot(a_scratch[...], wb_ref[...], preferred_element_type=jnp.float32)
    o_ref[...] = (frozen + lora + bias_ref[...]).astype(o_ref.dtype)


def lora_qkv_forward(x, params, *, tm=512, tn=None):
    """Fused LoRAQKV forward.  x: [B, N, D] -> [B, N, O].  `params` from prepare_lora_qkv_params."""
    B, N, D = x.shape
    assert D == params["in_features"], "input feature dim mismatch"
    O = params["out_features"]
    r_pad = params["rank_padded"]
    cdt = params["compute_dtype"]
    wqkv_t, wa_t, wb_t, bias = (params["wqkv_t"], params["wa_t"],
                                params["wb_t"], params["bias"])
    o_pad = wqkv_t.shape[1]
    M = B * N
    out_dtype = x.dtype

    x_isz = jnp.dtype(x.dtype).itemsize
    c_isz = jnp.dtype(cdt).itemsize
    out_isz = jnp.dtype(out_dtype).itemsize

    # Row tile: large (amortizes Wqkv^T re-streaming from HBM), clamped for small M; split
    # once so the "parallel" i axis can feed both TensorCores on megacore parts.
    tm_eff = min(tm, _round_up(M, 16))
    if M >= 256 and _round_up(M, tm_eff) // tm_eff < 2:
        tm_eff = _round_up((M + 1) // 2, 16)
    m_pad = _round_up(M, tm_eff)

    # Output tile: largest 128-multiple divisor of o_pad whose double-buffered working set
    # fits the VMEM budget. On 128-MiB parts (v5e/v6e) this usually collapses the j axis to 1;
    # on v7x (64 MiB) or very wide O it stays tiled.
    vmem_cap = _vmem_capacity_bytes()
    budget = int(0.7 * vmem_cap)

    def footprint(tn_):
        return (2 * tm_eff * D * x_isz            # x tile (double buffered)
                + 2 * D * tn_ * c_isz             # Wqkv^T slice
                + 2 * r_pad * tn_ * c_isz         # scaled Wb^T slice
                + 2 * D * r_pad * c_isz           # Wa^T (grid invariant, budget 2 anyway)
                + 2 * tn_ * 4                     # combined bias (f32)
                + 2 * tm_eff * tn_ * out_isz      # output tile
                + tm_eff * r_pad * c_isz)         # a scratch

    if tn is None:
        n_units = o_pad // 128
        tn_eff = 128
        for k in range(n_units, 0, -1):
            if n_units % k == 0 and footprint(k * 128) <= budget:
                tn_eff = k * 128
                break
    else:
        tn_eff = max(128, min(_round_up(tn, 128), o_pad))
        while o_pad % tn_eff:
            tn_eff -= 128

    vmem_limit = int(min(vmem_cap,
                         max(32 << 20, int(footprint(tn_eff) * 1.3) + (2 << 20))))

    # M padding only when the token count is not a tile multiple (no-op otherwise).
    x2 = _pad_axis(x.reshape(M, D), 0, m_pad)

    grid = (m_pad // tm_eff, o_pad // tn_eff)

    out = pl.pallas_call(
        _lora_qkv_kernel,
        out_shape=jax.ShapeDtypeStruct((m_pad, o_pad), out_dtype),
        grid_spec=pltpu.PrefetchScalarGridSpec(
            num_scalar_prefetch=0,
            grid=grid,
            in_specs=[
                pl.BlockSpec((tm_eff, D), lambda i, j: (i, 0)),        # x rows (j-invariant)
                pl.BlockSpec((D, tn_eff), lambda i, j: (0, j)),        # Wqkv^T slice
                pl.BlockSpec((D, r_pad), lambda i, j: (0, 0)),         # Wa^T (invariant)
                pl.BlockSpec((r_pad, tn_eff), lambda i, j: (0, j)),    # scaled Wb^T slice
                pl.BlockSpec((1, tn_eff), lambda i, j: (0, j)),        # combined bias slice
            ],
            out_specs=pl.BlockSpec((tm_eff, tn_eff), lambda i, j: (i, j)),
            scratch_shapes=[pltpu.VMEM((tm_eff, r_pad), cdt)],
        ),
        compiler_params=pltpu.CompilerParams(
            dimension_semantics=("parallel", "arbitrary"),
            vmem_limit_bytes=vmem_limit,
        ),
    )(x2, wqkv_t, wa_t, wb_t, bias)

    if m_pad != M or o_pad != O:
        out = out[:M, :O]
    return out.reshape(B, N, O)


if __name__ == "__main__":
    # Small, deterministic setup consistent with the module:
    #   in_features = D = 32, out_features = 3*D = 96 (qkv), rank = 4, alpha = 8.0
    B, N, D = 2, 8, 32
    R = 4
    O = 3 * D
    alpha = 8.0
    scaling = alpha / R

    key = jax.random.PRNGKey(0)
    kx, kq, kbq, ka, kba, kb, kbb = jax.random.split(key, 7)

    x = jax.random.normal(kx, (B, N, D), dtype=jnp.float32)
    w_qkv = 0.05 * jax.random.normal(kq, (O, D), dtype=jnp.float32)
    b_qkv = 0.01 * jax.random.normal(kbq, (O,), dtype=jnp.float32)
    w_a = 0.05 * jax.random.normal(ka, (R, D), dtype=jnp.float32)
    b_a = 0.01 * jax.random.normal(kba, (R,), dtype=jnp.float32)
    w_b = 0.05 * jax.random.normal(kb, (O, R), dtype=jnp.float32)
    b_b = 0.01 * jax.random.normal(kbb, (O,), dtype=jnp.float32)

    # Pure-JAX reference (same semantics as the PyTorch module).
    frozen = jnp.einsum("bnd,od->bno", x, w_qkv) + b_qkv
    a_ref = jnp.einsum("bnd,rd->bnr", x, w_a) + b_a
    b_ref = jnp.einsum("bnr,or->bno", a_ref, w_b) + b_b
    ref = frozen + scaling * b_ref

    # Exact-semantics check: f32 compute path, tight tolerance.
    params_f32 = prepare_lora_qkv_params(w_qkv, b_qkv, w_a, b_a, w_b, b_b, scaling,
                                         compute_dtype=jnp.float32)
    out = jax.block_until_ready(lora_qkv_forward(x, params_f32))
    assert out.shape == (B, N, O)
    assert jnp.allclose(out, ref, atol=1e-4, rtol=1e-4)

    # Default production path: bf16 weights/activations, f32 accumulation (looser tolerance).
    params_bf16 = prepare_lora_qkv_params(w_qkv, b_qkv, w_a, b_a, w_b, b_b, scaling)
    out_bf16 = jax.block_until_ready(lora_qkv_forward(x, params_bf16))
    assert out_bf16.shape == (B, N, O)
    assert jnp.allclose(out_bf16, ref, atol=3e-2, rtol=3e-2)

    print("KERNEL_OK")
</pallas_src>

<mosaic_0001>
module attributes {stable_mosaic.version = 11 : i64} {
  func.func @_lora_qkv_kernel(%arg0: i32, %arg1: i32, %arg2: memref<16x32xf32, #tpu.memory_space<vmem>>, %arg3: memref<32x128xf32, #tpu.memory_space<vmem>>, %arg4: memref<32x128xf32, #tpu.memory_space<vmem>>, %arg5: memref<128x128xf32, #tpu.memory_space<vmem>>, %arg6: memref<1x128xf32, #tpu.memory_space<vmem>>, %arg7: memref<16x128xf32, #tpu.memory_space<vmem>>, %arg8: memref<16x128xf32, #tpu.memory_space<vmem>>) attributes {dimension_semantics = [#tpu.dimension_semantics<parallel>, #tpu.dimension_semantics<arbitrary>], iteration_bounds = array<i64: 1, 1>, scalar_prefetch = 0 : i64, scratch_operands = 1 : i64, tpu.core_type = #tpu.core_type<tc>, window_params = [{transform_indices = @transform_0, window_bounds = array<i64: 16, 32>}, {transform_indices = @transform_1, window_bounds = array<i64: 32, 128>}, {pipeline_mode = #tpu.pipeline_mode<synchronous>, transform_indices = @transform_2, window_bounds = array<i64: 32, 128>}, {transform_indices = @transform_3, window_bounds = array<i64: 128, 128>}, {transform_indices = @transform_4, window_bounds = array<i64: 1, 128>}, {transform_indices = @transform_5, window_bounds = array<i64: 16, 128>}]} {
    %c0 = arith.constant 0 : index
    %c0_0 = arith.constant 0 : index
    %0 = vector.load %arg2[%c0, %c0_0] : memref<16x32xf32, #tpu.memory_space<vmem>>, vector<16x32xf32>
    %c0_i32 = arith.constant 0 : i32
    %1 = arith.cmpi eq, %arg1, %c0_i32 : i32
    %2 = arith.extui %1 : i1 to i32
    %c0_i32_1 = arith.constant 0 : i32
    %3 = arith.cmpi ne, %2, %c0_i32_1 : i32
    scf.if %3 {
      %c0_13 = arith.constant 0 : index
      %c0_14 = arith.constant 0 : index
      %14 = vector.load %arg4[%c0_13, %c0_14] : memref<32x128xf32, #tpu.memory_space<vmem>>, vector<32x128xf32>
      %cst_15 = arith.constant dense<0.000000e+00> : vector<16x128xf32>
      %15 = tpu.matmul %0, %14, %cst_15 {dimension_numbers = #tpu.dot_dimension_numbers<[1], [0], [0], [1], [0, 0, 1, 1], [], []>} : vector<16x32xf32>, vector<32x128xf32>, vector<16x128xf32> -> vector<16x128xf32>
      %c0_16 = arith.constant 0 : index
      %c0_17 = arith.constant 0 : index
      %16 = vector.load %arg8[%c0_16, %c0_17] : memref<16x128xf32, #tpu.memory_space<vmem>>, vector<16x128xf32>
      tpu.vector_store %arg8[%c0_16, %c0_17], %15 {strides = array<i32>} : memref<16x128xf32, #tpu.memory_space<vmem>>, vector<16x128xf32>,
    } else {
    }
    %c0_2 = arith.constant 0 : index
    %c0_3 = arith.constant 0 : index
    %4 = vector.load %arg3[%c0_2, %c0_3] : memref<32x128xf32, #tpu.memory_space<vmem>>, vector<32x128xf32>
    %cst = arith.constant dense<0.000000e+00> : vector<16x128xf32>
    %5 = tpu.matmul %0, %4, %cst {dimension_numbers = #tpu.dot_dimension_numbers<[1], [0], [0], [1], [0, 0, 1, 1], [], []>} : vector<16x32xf32>, vector<32x128xf32>, vector<16x128xf32> -> vector<16x128xf32>
    %c0_4 = arith.constant 0 : index
    %c0_5 = arith.constant 0 : index
    %6 = vector.load %arg8[%c0_4, %c0_5] : memref<16x128xf32, #tpu.memory_space<vmem>>, vector<16x128xf32>
    %c0_6 = arith.constant 0 : index
    %c0_7 = arith.constant 0 : index
    %7 = vector.load %arg5[%c0_6, %c0_7] : memref<128x128xf32, #tpu.memory_space<vmem>>, vector<128x128xf32>
    %cst_8 = arith.constant dense<0.000000e+00> : vector<16x128xf32>
    %8 = tpu.matmul %6, %7, %cst_8 {dimension_numbers = #tpu.dot_dimension_numbers<[1], [0], [0], [1], [0, 0, 1, 1], [], []>} : vector<16x128xf32>, vector<128x128xf32>, vector<16x128xf32> -> vector<16x128xf32>
    %9 = arith.addf %5, %8 : vector<16x128xf32>
    %c0_9 = arith.constant 0 : index
    %c0_10 = arith.constant 0 : index
    %10 = vector.load %arg6[%c0_9, %c0_10] : memref<1x128xf32, #tpu.memory_space<vmem>>, vector<1x128xf32>
    %11 = vector.broadcast %10 : vector<1x128xf32> to vector<16x128xf32>
    %12 = arith.addf %9, %11 : vector<16x128xf32>
    %c0_11 = arith.constant 0 : index
    %c0_12 = arith.constant 0 : index
    %13 = vector.load %arg7[%c0_11, %c0_12] : memref<16x128xf32, #tpu.memory_space<vmem>>, vector<16x128xf32>
    tpu.vector_store %arg7[%c0_11, %c0_12], %12 {strides = array<i32>} : memref<16x128xf32, #tpu.memory_space<vmem>>, vector<16x128xf32>,
    return
  }
  func.func @transform_0(%arg0: i32, %arg1: i32) -> (i32, i32) {
    %c0_i32 = arith.constant 0 : i32
    %c0_i32_0 = arith.constant 0 : i32
    return %arg0, %c0_i32 : i32, i32
  }
  func.func @transform_1(%arg0: i32, %arg1: i32) -> (i32, i32) {
    %c0_i32 = arith.constant 0 : i32
    %c0_i32_0 = arith.constant 0 : i32
    return %c0_i32, %arg1 : i32, i32
  }
  func.func @transform_2(%arg0: i32, %arg1: i32) -> (i32, i32) {
    %c0_i32 = arith.constant 0 : i32
    %c0_i32_0 = arith.constant 0 : i32
    %c0_i32_1 = arith.constant 0 : i32
    return %c0_i32, %c0_i32_0 : i32, i32
  }
  func.func @transform_3(%arg0: i32, %arg1: i32) -> (i32, i32) {
    %c0_i32 = arith.constant 0 : i32
    %c0_i32_0 = arith.constant 0 : i32
    return %c0_i32, %arg1 : i32, i32
  }
  func.func @transform_4(%arg0: i32, %arg1: i32) -> (i32, i32) {
    %c0_i32 = arith.constant 0 : i32
    %c0_i32_0 = arith.constant 0 : i32
    return %c0_i32, %arg1 : i32, i32
  }
  func.func @transform_5(%arg0: i32, %arg1: i32) -> (i32, i32) {
    %c0_i32 = arith.constant 0 : i32
    return %arg0, %arg1 : i32, i32
  }
}

</mosaic_0001>

<llo_original>
// kernel: tpu_custom_call.1
$region0: #{tpu_custom_call.1}
  #allocation0 [shape = 'u32[]', space=smem, size = 0x4, offset = 0x4, fixed_abs, tag = 'smem constant byte address 0x4 - core index']
  #allocation1 [shape = 'u32[144,128]{1,0:T(1,128)}', space=vmem, size = 0x12000, scoped, tag = 'internal scratch']
  #allocation2 [shape = 'f32[16,128]{1,0:T(8,128)}', space=vmem, size = 0x2000, scoped, tag = 'scratch operand']
  %s0 = inlined_call_operand.hbm [shape: f32[16,32], index: 0, kind: input, shape index: {}]
  %s1 = inlined_call_operand.hbm [shape: f32[32,128], index: 1, kind: input, shape index: {}]
  %s2 = inlined_call_operand.hbm [shape: f32[32,128], index: 2, kind: input, shape index: {}]
  %s3 = inlined_call_operand.hbm [shape: f32[128,128], index: 3, kind: input, shape index: {}]
  %s4 = inlined_call_operand.vmem [shape: f32[1,128], index: 4, kind: input, shape index: {}]
  %s5 = inlined_call_operand.hbm [shape: f32[16,128], index: 5, kind: output, shape index: {}]
  %s6 = sld [smem:[#allocation0]]
  $region50: #{tpu_custom_call.1} parent=0
    _
  %s8 = ssub.s32 1, %s6
  %s9 = scalar_select 0, %s8, %s6
  $region1: #{tpu_custom_call.1} parent=0
    #allocation3 [shape = 'u8[8192]{0}', space=vmem, size = 0x2000, scoped, tag = 'input window, operand 0, single buffered']
    #allocation4 [shape = 's32[1]{0}', space=sflag, size = 0x4, scoped, tag = 'scoped memory for tpu_custom_call.1']
    #allocation5 [shape = 's32[1]{0}', space=sflag, size = 0x4, scoped, tag = 'scoped memory for tpu_custom_call.1']
    #allocation6 [shape = 'u8[16384]{0}', space=vmem, size = 0x4000, scoped, tag = 'input window, operand 1, single buffered']
    #allocation7 [shape = 's32[1]{0}', space=sflag, size = 0x4, scoped, tag = 'scoped memory for tpu_custom_call.1']
    #allocation8 [shape = 'u8[16384]{0}', space=vmem, size = 0x4000, scoped, tag = 'input window, operand 2, single buffered']
    #allocation9 [shape = 'u8[65536]{0}', space=vmem, size = 0x10000, scoped, tag = 'input window, operand 3, single buffered']
    #allocation10 [shape = 's32[1]{0}', space=sflag, size = 0x4, scoped, tag = 'scoped memory for tpu_custom_call.1']
    #allocation11 [shape = 'u8[8192]{0}', space=vmem, size = 0x2000, scoped, tag = 'output window, operand 0, single buffered']
    %10 = vsyncpa [#allocation4], 0
    %11 = vsyncpa [#allocation7], 0
    %12 = vsyncpa [#allocation10], 0
    %13 = vsyncpa [#allocation5], 0
    // Predicated region
    $region2: #{tpu_custom_call.1} parent=1 // pred_check
      _
    $region3: #{tpu_custom_call.1} parent=1 // pred_check_branch
      %15 = sbr.rel (0) target = $region5
    $region4: #{tpu_custom_call.1} parent=1 // pred_region
      %s17 = ssub.s32 256, 256
      %18 = vsyncadd [#allocation4], %s17
      %s19 = sshll.u32 [#allocation3], 4
      %s20 = int_to_ptr.vmem [resolvable:$true] %s19
      %25 = dma.hbm_to_vmem [thread:$0]  %s0, 256, %s20, [#allocation4], 128, 128, 8
    $region5: #{tpu_custom_call.1} parent=1 // pred_fallthru
      _
    // Predicated region
    $region6: #{tpu_custom_call.1} parent=1 // pred_check
      _
    $region7: #{tpu_custom_call.1} parent=1 // pred_check_branch
      %27 = sbr.rel (0) target = $region9
    $region8: #{tpu_custom_call.1} parent=1 // pred_region
      %s29 = ssub.s32 512, 512
      %30 = vsyncadd [#allocation7], %s29
      %s31 = sshll.u32 [#allocation6], 4
      %s32 = int_to_ptr.vmem [resolvable:$true] %s31
      %37 = dma.hbm_to_vmem [thread:$0]  %s1, 512, %s32, [#allocation7], 128, 128, 8
    $region9: #{tpu_custom_call.1} parent=1 // pred_fallthru
      _
    // Predicated region
    $region10: #{tpu_custom_call.1} parent=1 // pred_check
      _
    $region11: #{tpu_custom_call.1} parent=1 // pred_check_branch
      %39 = sbr.rel (0) target = $region13
    $region12: #{tpu_custom_call.1} parent=1 // pred_region
      %s41 = ssub.s32 512, 512
      %42 = vsyncadd [#allocation7], %s41
      %s43 = sshll.u32 [#allocation8], 4
      %s44 = int_to_ptr.vmem [resolvable:$true] %s43
      %49 = dma.hbm_to_vmem [thread:$0]  %s2, 512, %s44, [#allocation7], 128, 128, 8
    $region13: #{tpu_custom_call.1} parent=1 // pred_fallthru
      _
    // Predicated region
    $region14: #{tpu_custom_call.1} parent=1 // pred_check
      _
    $region15: #{tpu_custom_call.1} parent=1 // pred_check_branch
      %51 = sbr.rel (0) target = $region17
    $region16: #{tpu_custom_call.1} parent=1 // pred_region
      %s53 = ssub.s32 2048, 2048
      %54 = vsyncadd [#allocation10], %s53
      %s55 = sshll.u32 [#allocation9], 4
      %s56 = int_to_ptr.vmem [resolvable:$true] %s55
      %61 = dma.hbm_to_vmem [thread:$0]  %s3, 2048, %s56, [#allocation10], 128, 128, 8
    $region17: #{tpu_custom_call.1} parent=1 // pred_fallthru
      _
    // Predicated region
    $region18: #{tpu_custom_call.1} parent=1 // pred_check
      _
    $region19: #{tpu_custom_call.1} parent=1 // pred_check_branch
      %63 = sbr.rel (0) target = $region21
    $region20: #{tpu_custom_call.1} parent=1 // pred_region
      _
    $region21: #{tpu_custom_call.1} parent=1 // pred_fallthru
      _
    // Predicated region
    $region22: #{tpu_custom_call.1} parent=1 // pred_check
      _
    $region23: #{tpu_custom_call.1} parent=1 // pred_check_branch
      %65 = sbr.rel (0) target = $region25
    $region24: #{tpu_custom_call.1} parent=1 // pred_region
      %66 = dma.done [#allocation4], 256
    $region25: #{tpu_custom_call.1} parent=1 // pred_fallthru
      _
    // Predicated region
    $region26: #{tpu_custom_call.1} parent=1 // pred_check
      _
    $region27: #{tpu_custom_call.1} parent=1 // pred_check_branch
      %68 = sbr.rel (0) target = $region29
    $region28: #{tpu_custom_call.1} parent=1 // pred_region
      %69 = dma.done [#allocation7], 512
    $region29: #{tpu_custom_call.1} parent=1 // pred_fallthru
      _
    // Predicated region
    $region30: #{tpu_custom_call.1} parent=1 // pred_check
      _
    $region31: #{tpu_custom_call.1} parent=1 // pred_check_branch
      %71 = sbr.rel (0) target = $region33
    $region32: #{tpu_custom_call.1} parent=1 // pred_region
      %72 = dma.done [#allocation7], 512
    $region33: #{tpu_custom_call.1} parent=1 // pred_fallthru
      _
    // Predicated region
    $region34: #{tpu_custom_call.1} parent=1 // pred_check
      _
    $region35: #{tpu_custom_call.1} parent=1 // pred_check_branch
      %74 = sbr.rel (0) target = $region37
    $region36: #{tpu_custom_call.1} parent=1 // pred_region
      %75 = dma.done [#allocation10], 2048
    $region37: #{tpu_custom_call.1} parent=1 // pred_fallthru
      _
    %v76 = vld [vmem:[#allocation3] sm:$0xff]
    %v77 = vld [vmem:[#allocation3 + $0x8] sm:$0xff]
    %p78 = scmp.eq.s32.totalorder 0, 0
    // Predicated region
    $region38: #{tpu_custom_call.1} parent=1 // pred_check
      %p79 = pneg %p78
    $region39: #{tpu_custom_call.1} parent=1 // pred_check_branch
      %81 = sbr.rel (%p79) target = $region41
    $region40: #{tpu_custom_call.1} parent=1 // pred_region
      %v82 = vld [vmem:[#allocation8] sm:$0xff]
      %v83 = vld [vmem:[#allocation8 + $0x8] sm:$0xff]
      %v84 = vld [vmem:[#allocation8 + $0x10] sm:$0xff]
      %v85 = vld [vmem:[#allocation8 + $0x18] sm:$0xff]
      %vm86 = vcmask 261120
      %v88 = vsel %vm86, %v76, 0
      %v91 = vsel %vm86, %v77, 0
      %93 = vmatprep.subr.mxu0 0.0
      %94 = vmatpush1.msra.mxu0 0.0
      %95 = vmatprep.subr.mxu0 0.0
      %96 = vmatpush1.msra.mxu0 0.0
      %97 = vmatprep.subr.mxu0 0.0
      %98 = vmatpush1.msra.mxu0 0.0
      %99 = vmatprep.subr.mxu0 0.0
      %100 = vmatpush1.msra.mxu0 0.0
      %101 = vmatprep.subr.mxu0 0.0
      %102 = vmatpush1.msra.mxu0 0.0
      %103 = vmatprep.subr.mxu0 0.0
      %104 = vmatpush1.msra.mxu0 0.0
      %105 = vmatprep.subr.mxu0 0.0
      %106 = vmatpush1.msra.mxu0 0.0
      %107 = vmatprep.subr.mxu0 0.0
      %108 = vmatpush1.msra.mxu0 0.0
      %109 = vmatprep.subr.mxu0 0.0
      %110 = vmatpush1.msra.mxu0 0.0
      %111 = vmatprep.subr.mxu0 0.0
      %112 = vmatpush1.msra.mxu0 0.0
      %113 = vmatprep.subr.mxu0 0.0
      %114 = vmatpush1.msra.mxu0 0.0
      %115 = vmatprep.subr.mxu0 0.0
      %116 = vmatpush1.msra.mxu0 0.0
      %117 = vmatprep.subr.mxu0 0.0
      %118 = vmatpush1.msra.mxu0 %v85
      %119 = vmatprep.subr.mxu0 0.0
      %120 = vmatpush1.msra.mxu0 %v84
      %121 = vmatprep.subr.mxu0 0.0
      %122 = vmatpush1.msra.mxu0 %v83
      %123 = vmatprep.subr.mxu0 0.0
      %124 = vmatpush1.msra.mxu0 %v82
      %125 = vmatprep.subr.mxu0 0.0
      %126 = vmatpush2.msra.mxu0 0.0
      %127 = vmatprep.subr.mxu0 0.0
      %128 = vmatpush2.msra.mxu0 0.0
      %129 = vmatprep.subr.mxu0 0.0
      %130 = vmatpush2.msra.mxu0 0.0
      %131 = vmatprep.subr.mxu0 0.0
      %132 = vmatpush2.msra.mxu0 0.0
      %133 = vmatprep.subr.mxu0 0.0
      %134 = vmatpush2.msra.mxu0 0.0
      %135 = vmatprep.subr.mxu0 0.0
      %136 = vmatpush2.msra.mxu0 0.0
      %137 = vmatprep.subr.mxu0 0.0
      %138 = vmatpush2.msra.mxu0 0.0
      %139 = vmatprep.subr.mxu0 0.0
      %140 = vmatpush2.msra.mxu0 0.0
      %141 = vmatprep.subr.mxu0 0.0
      %142 = vmatpush2.msra.mxu0 0.0
      %143 = vmatprep.subr.mxu0 0.0
      %144 = vmatpush2.msra.mxu0 0.0
      %145 = vmatprep.subr.mxu0 0.0
      %146 = vmatpush2.msra.mxu0 0.0
      %147 = vmatprep.subr.mxu0 0.0
      %148 = vmatpush2.msra.mxu0 0.0
      %149 = vmatprep.subr.mxu0 0.0
      %150 = vmatpush2.msra.mxu0 0.0
      %151 = vmatprep.subr.mxu0 0.0
      %152 = vmatpush2.msra.mxu0 0.0
      %153 = vmatprep.subr.mxu0 0.0
      %154 = vmatpush2.msra.mxu0 0.0
      %155 = vmatprep.subr.mxu0 0.0
      %156 = vmatpush2.msra.mxu0 0.0
      %157 = vmatprep.mubr.f32.mxu0 0.0
      %158 = vmatmul.mubr.f32.gmra.mxu0 %v88
      %v159 = vpop.f32.mrf.mxu0
      %v160 = vadd.f32 0.0, %v159
      %v161 = vpop.f32.mrf.mxu0
      %162 = vmatprep.mubr.f32.mxu0 0.0
      %163 = vmatmul.mubr.f32.gmra.mxu0 %v91
      %v164 = vpop.f32.mrf.mxu0
      %v165 = vadd.f32 0.0, %v164
      %v166 = vpop.f32.mrf.mxu0
      %167 = vdwg.mxu0
      %168 = vst [vmem:[#allocation2] sm:$0xff] %v160
      %169 = vst [vmem:[#allocation2 + $0x8] sm:$0xff] %v165
    $region41: #{tpu_custom_call.1} parent=1 // pred_fallthru
      _
    %v170 = vld [vmem:[#allocation6] sm:$0xff]
    %v171 = vld [vmem:[#allocation6 + $0x8] sm:$0xff]
    %v172 = vld [vmem:[#allocation6 + $0x10] sm:$0xff]
    %v173 = vld [vmem:[#allocation6 + $0x18] sm:$0xff]
    %v174 = vld [vmem:[#allocation2] sm:$0xff]
    %v175 = vld [vmem:[#allocation2 + $0x8] sm:$0xff]
    %v176 = vld [vmem:[#allocation9] sm:$0xff]
    %v177 = vld [vmem:[#allocation9 + $0x8] sm:$0xff]
    %v178 = vld [vmem:[#allocation9 + $0x10] sm:$0xff]
    %v179 = vld [vmem:[#allocation9 + $0x18] sm:$0xff]
    %v180 = vld [vmem:[#allocation9 + $0x20] sm:$0xff]
    %v181 = vld [vmem:[#allocation9 + $0x28] sm:$0xff]
    %v182 = vld [vmem:[#allocation9 + $0x30] sm:$0xff]
    %v183 = vld [vmem:[#allocation9 + $0x38] sm:$0xff]
    %v184 = vld [vmem:[#allocation9 + $0x40] sm:$0xff]
    %v185 = vld [vmem:[#allocation9 + $0x48] sm:$0xff]
    %v186 = vld [vmem:[#allocation9 + $0x50] sm:$0xff]
    %v187 = vld [vmem:[#allocation9 + $0x58] sm:$0xff]
    %v188 = vld [vmem:[#allocation9 + $0x60] sm:$0xff]
    %v189 = vld [vmem:[#allocation9 + $0x68] sm:$0xff]
    %v190 = vld [vmem:[#allocation9 + $0x70] sm:$0xff]
    %v191 = vld [vmem:[#allocation9 + $0x78] sm:$0xff]
    %192 = vmatprep.subr.mxu0 0.0
    %193 = vmatpush1.msra.mxu0 %v191
    %194 = vmatprep.subr.mxu0 0.0
    %195 = vmatpush1.msra.mxu0 %v190
    %196 = vmatprep.subr.mxu0 0.0
    %197 = vmatpush1.msra.mxu0 %v189
    %198 = vmatprep.subr.mxu0 0.0
    %199 = vmatpush1.msra.mxu0 %v188
    %200 = vmatprep.subr.mxu0 0.0
    %201 = vmatpush1.msra.mxu0 %v187
    %202 = vmatprep.subr.mxu0 0.0
    %203 = vmatpush1.msra.mxu0 %v186
    %204 = vmatprep.subr.mxu0 0.0
    %205 = vmatpush1.msra.mxu0 %v185
    %206 = vmatprep.subr.mxu0 0.0
    %207 = vmatpush1.msra.mxu0 %v184
    %208 = vmatprep.subr.mxu0 0.0
    %209 = vmatpush1.msra.mxu0 %v183
    %210 = vmatprep.subr.mxu0 0.0
    %211 = vmatpush1.msra.mxu0 %v182
    %212 = vmatprep.subr.mxu0 0.0
    %213 = vmatpush1.msra.mxu0 %v181
    %214 = vmatprep.subr.mxu0 0.0
    %215 = vmatpush1.msra.mxu0 %v180
    %216 = vmatprep.subr.mxu0 0.0
    %217 = vmatpush1.msra.mxu0 %v179
    %218 = vmatprep.subr.mxu0 0.0
    %219 = vmatpush1.msra.mxu0 %v178
    %220 = vmatprep.subr.mxu0 0.0
    %221 = vmatpush1.msra.mxu0 %v177
    %222 = vmatprep.subr.mxu0 0.0
    %223 = vmatpush1.msra.mxu0 %v176
    %224 = vmatprep.subr.mxu0 0.0
    %225 = vmatpush2.msra.mxu0 0.0
    %226 = vmatprep.subr.mxu0 0.0
    %227 = vmatpush2.msra.mxu0 0.0
    %228 = vmatprep.subr.mxu0 0.0
    %229 = vmatpush2.msra.mxu0 0.0
    %230 = vmatprep.subr.mxu0 0.0
    %231 = vmatpush2.msra.mxu0 0.0
    %232 = vmatprep.subr.mxu0 0.0
    %233 = vmatpush2.msra.mxu0 0.0
    %234 = vmatprep.subr.mxu0 0.0
    %235 = vmatpush2.msra.mxu0 0.0
    %236 = vmatprep.subr.mxu0 0.0
    %237 = vmatpush2.msra.mxu0 0.0
    %238 = vmatprep.subr.mxu0 0.0
    %239 = vmatpush2.msra.mxu0 0.0
    %240 = vmatprep.subr.mxu0 0.0
    %241 = vmatpush2.msra.mxu0 0.0
    %242 = vmatprep.subr.mxu0 0.0
    %243 = vmatpush2.msra.mxu0 0.0
    %244 = vmatprep.subr.mxu0 0.0
    %245 = vmatpush2.msra.mxu0 0.0
    %246 = vmatprep.subr.mxu0 0.0
    %247 = vmatpush2.msra.mxu0 0.0
    %248 = vmatprep.subr.mxu0 0.0
    %249 = vmatpush2.msra.mxu0 0.0
    %250 = vmatprep.subr.mxu0 0.0
    %251 = vmatpush2.msra.mxu0 0.0
    %252 = vmatprep.subr.mxu0 0.0
    %253 = vmatpush2.msra.mxu0 0.0
    %254 = vmatprep.subr.mxu0 0.0
    %255 = vmatpush2.msra.mxu0 0.0
    %256 = vmatprep.mubr.f32.mxu0 0.0
    %257 = vmatmul.mubr.f32.gmra.mxu0 %v174
    %v258 = vpop.f32.mrf.mxu0
    %v259 = vadd.f32 0.0, %v258
    %v260 = vpop.f32.mrf.mxu0
    %261 = vmatprep.mubr.f32.mxu0 0.0
    %262 = vmatmul.mubr.f32.gmra.mxu0 %v175
    %v263 = vpop.f32.mrf.mxu0
    %v264 = vadd.f32 0.0, %v263
    %v265 = vpop.f32.mrf.mxu0
    %266 = vdwg.mxu0
    %vm267 = vcmask 261120
    %v269 = vsel %vm267, %v76, 0
    %v272 = vsel %vm267, %v77, 0
    %274 = vmatprep.subr.mxu0 0.0
    %275 = vmatpush1.msra.mxu0 0.0
    %276 = vmatprep.subr.mxu0 0.0
    %277 = vmatpush1.msra.mxu0 0.0
    %278 = vmatprep.subr.mxu0 0.0
    %279 = vmatpush1.msra.mxu0 0.0
    %280 = vmatprep.subr.mxu0 0.0
    %281 = vmatpush1.msra.mxu0 0.0
    %282 = vmatprep.subr.mxu0 0.0
    %283 = vmatpush1.msra.mxu0 0.0
    %284 = vmatprep.subr.mxu0 0.0
    %285 = vmatpush1.msra.mxu0 0.0
    %286 = vmatprep.subr.mxu0 0.0
    %287 = vmatpush1.msra.mxu0 0.0
    %288 = vmatprep.subr.mxu0 0.0
    %289 = vmatpush1.msra.mxu0 0.0
    %290 = vmatprep.subr.mxu0 0.0
    %291 = vmatpush1.msra.mxu0 0.0
    %292 = vmatprep.subr.mxu0 0.0
    %293 = vmatpush1.msra.mxu0 0.0
    %294 = vmatprep.subr.mxu0 0.0
    %295 = vmatpush1.msra.mxu0 0.0
    %296 = vmatprep.subr.mxu0 0.0
    %297 = vmatpush1.msra.mxu0 0.0
    %298 = vmatprep.subr.mxu0 0.0
    %299 = vmatpush1.msra.mxu0 %v173
    %300 = vmatprep.subr.mxu0 0.0
    %301 = vmatpush1.msra.mxu0 %v172
    %302 = vmatprep.subr.mxu0 0.0
    %303 = vmatpush1.msra.mxu0 %v171
    %304 = vmatprep.subr.mxu0 0.0
    %305 = vmatpush1.msra.mxu0 %v170
    %306 = vmatprep.subr.mxu0 0.0
    %307 = vmatpush2.msra.mxu0 0.0
    %308 = vmatprep.subr.mxu0 0.0
    %309 = vmatpush2.msra.mxu0 0.0
    %310 = vmatprep.subr.mxu0 0.0
    %311 = vmatpush2.msra.mxu0 0.0
    %312 = vmatprep.subr.mxu0 0.0
    %313 = vmatpush2.msra.mxu0 0.0
    %314 = vmatprep.subr.mxu0 0.0
    %315 = vmatpush2.msra.mxu0 0.0
    %316 = vmatprep.subr.mxu0 0.0
    %317 = vmatpush2.msra.mxu0 0.0
    %318 = vmatprep.subr.mxu0 0.0
    %319 = vmatpush2.msra.mxu0 0.0
    %320 = vmatprep.subr.mxu0 0.0
    %321 = vmatpush2.msra.mxu0 0.0
    %322 = vmatprep.subr.mxu0 0.0
    %323 = vmatpush2.msra.mxu0 0.0
    %324 = vmatprep.subr.mxu0 0.0
    %325 = vmatpush2.msra.mxu0 0.0
    %326 = vmatprep.subr.mxu0 0.0
    %327 = vmatpush2.msra.mxu0 0.0
    %328 = vmatprep.subr.mxu0 0.0
    %329 = vmatpush2.msra.mxu0 0.0
    %330 = vmatprep.subr.mxu0 0.0
    %331 = vmatpush2.msra.mxu0 0.0
    %332 = vmatprep.subr.mxu0 0.0
    %333 = vmatpush2.msra.mxu0 0.0
    %334 = vmatprep.subr.mxu0 0.0
    %335 = vmatpush2.msra.mxu0 0.0
    %336 = vmatprep.subr.mxu0 0.0
    %337 = vmatpush2.msra.mxu0 0.0
    %338 = vmatprep.mubr.f32.mxu0 0.0
    %339 = vmatmul.mubr.f32.gmra.mxu0 %v269
    %v340 = vpop.f32.mrf.mxu0
    %v341 = vadd.f32 %v259, %v340
    %v342 = vpop.f32.mrf.mxu0
    %343 = vmatprep.mubr.f32.mxu0 0.0
    %344 = vmatmul.mubr.f32.gmra.mxu0 %v272
    %v345 = vpop.f32.mrf.mxu0
    %v346 = vadd.f32 %v264, %v345
    %v347 = vpop.f32.mrf.mxu0
    %348 = vdwg.mxu0
    %v349 = vld [vmem:[%s4] sm:$0x1]
    %v351 = vlaneseq
    %v352 = vshrl.u32 %v351, 7
    %v353 = vsub.s32 0, %v352
    %v354 = vrot.slane %v349, %v353
    %v356 = vadd.f32 %v341, %v354
    %v357 = vadd.f32 %v346, %v354
    %358 = vst [vmem:[#allocation11] sm:$0xff] %v356
    %359 = vst [vmem:[#allocation11 + $0x8] sm:$0xff] %v357
    // Predicated region
    $region42: #{tpu_custom_call.1} parent=1 // pred_check
      _
    $region43: #{tpu_custom_call.1} parent=1 // pred_check_branch
      %361 = sbr.rel (0) target = $region45
    $region44: #{tpu_custom_call.1} parent=1 // pred_region
      %s363 = ssub.s32 256, 256
      %364 = vsyncadd [#allocation5], %s363
      %s365 = sshll.u32 [#allocation11], 4
      %s366 = int_to_ptr.vmem [resolvable:$true] %s365
      %371 = dma.vmem_to_hbm [thread:$0]  %s366, 256, %s5, [#allocation5], 128, 128, 8
    $region45: #{tpu_custom_call.1} parent=1 // pred_fallthru
      _
    // Predicated region
    $region46: #{tpu_custom_call.1} parent=1 // pred_check
      _
    $region47: #{tpu_custom_call.1} parent=1 // pred_check_branch
      %373 = sbr.rel (0) target = $region49
    $region48: #{tpu_custom_call.1} parent=1 // pred_region
      %374 = dma.done [#allocation5], 256
    $region49: #{tpu_custom_call.1} parent=1 // pred_fallthru
      _
    %375 = vsyncpa [#allocation4], 1
    %376 = vsyncpa [#allocation7], 1
    %377 = vsyncpa [#allocation10], 1
    %378 = vsyncpa [#allocation5], 1

</llo_original>
